<compile_context>
chip_gen: v6e
topology: v6e:2x2x1
jax: 0.10.0
libtpu: 0.0.40
codegen_flags: <defaults>
</compile_context>

<pallas_src>
import functools

import jax
import jax.numpy as jnp
from jax.experimental import pallas as pl
from jax.experimental.pallas import tpu as pltpu


def _round_up(x, m):
    return (x + m - 1) // m * m


def _vmem_capacity_bytes():
    """Per-TensorCore VMEM capacity (v5e/v6e: 128 MiB, v7x: 64 MiB)."""
    try:
        return int(pltpu.get_tpu_info().vmem_capacity_bytes)
    except Exception:
        return 64 * 1024 * 1024  # conservative default: v7x per-core VMEM


# --------------------------------------------------------------------------- #
# Kernel
# --------------------------------------------------------------------------- #
def _fused_mlp_kernel(*refs, num_layers):
    """refs = (x_ref, w0_ref, b0_ref, ..., w{L-1}_ref, b{L-1}_ref, o_ref).

    x_ref:  (tm, K0_pad)        compute dtype (f32 or bf16)
    w_ref:  (K_pad_l, N_pad_l)  compute dtype, grid-invariant (VMEM resident)
    b_ref:  (1, N_pad_l)        f32,           grid-invariant (VMEM resident)
    o_ref:  (tm, N_pad_last)    output dtype
    """
    x_ref, o_ref = refs[0], refs[-1]
    act = x_ref[...]
    for l in range(num_layers):  # static unroll; activation never leaves the chip
        w_ref = refs[1 + 2 * l]
        b_ref = refs[2 + 2 * l]
        y = jnp.dot(act, w_ref[...], preferred_element_type=jnp.float32) + b_ref[...]
        if l < num_layers - 1:
            # cast-then-ReLU == ReLU-then-cast exactly (monotone cast, cast(0)=0);
            # on bf16 paths this halves the elementwise vregs touched
            # (v6e/v7x VPU is bf16-native). On f32 paths the cast is a no-op.
            act = jnp.maximum(y.astype(x_ref.dtype), 0.0)
        else:
            o_ref[...] = y.astype(o_ref.dtype)
    # TODO(synk): for very large tm * width, stage `act` through a VMEM scratch
    # (or split each layer over N-chunks) to bound live ranges across the unroll.


# --------------------------------------------------------------------------- #
# pallas_call wrapper
# --------------------------------------------------------------------------- #
def _fused_mlp_call(x_pad, ws, bs, *, tm, out_dtype):
    M_pad, K0 = x_pad.shape
    L = len(ws)
    N_out = ws[-1].shape[1]

    capacity = _vmem_capacity_bytes()
    budget = (capacity * 5) // 8  # ~40 MiB on v7x (64 MiB/TC), ~80 MiB on v5e/v6e

    out_itemsize = jnp.dtype(out_dtype).itemsize
    act_itemsize = x_pad.dtype.itemsize

    def footprint(wbuf):
        act_bytes = 2 * tm * K0 * act_itemsize + 2 * tm * N_out * out_itemsize
        w_bytes = wbuf * sum(int(w.size) * w.dtype.itemsize for w in ws)
        b_bytes = wbuf * sum(8 * int(b.shape[1]) * 4 for b in bs)  # (1,N) pads to 8 sublanes
        return act_bytes + w_bytes + b_bytes

    # Resident-weight fused path must fit per-core VMEM (re-derived per chip;
    # on v7x both TensorCores hold their own copy inside 64 MiB each).
    # TODO(synk): add a grid=(M_tiles, L) layer-streaming fallback (weights auto
    # double-buffered, layer l+1 DMA overlaps layer l matmul) for huge hidden dims.
    need_min = footprint(1)
    assert need_min <= budget, (
        f"fused-MLP resident weights exceed VMEM budget ({need_min} > {budget} bytes)")

    def run(single_buffer):
        wbuf = 1 if single_buffer else 2
        need = footprint(wbuf)
        vmem_limit = int(min(0.9 * capacity, max(2 * need, 16 * 1024 * 1024)))

        def wb_spec(shape):
            if single_buffer:
                # Grid-invariant block: one VMEM buffer, DMA'd once, no 2nd copy.
                return pl.BlockSpec(shape, lambda i: (0, 0),
                                    pipeline_mode=pl.Buffered(1))
            return pl.BlockSpec(shape, lambda i: (0, 0))

        in_specs = [pl.BlockSpec((tm, K0), lambda i: (i, 0))]  # activation tiles
        args = [x_pad]
        for w, b in zip(ws, bs):
            in_specs += [wb_spec(w.shape), wb_spec(b.shape)]
            args += [w, b]

        return pl.pallas_call(
            functools.partial(_fused_mlp_kernel, num_layers=L),
            out_shape=jax.ShapeDtypeStruct((M_pad, N_out), out_dtype),
            grid=(M_pad // tm,),
            in_specs=in_specs,
            out_specs=pl.BlockSpec((tm, N_out), lambda i: (i, 0)),
            compiler_params=pltpu.CompilerParams(
                dimension_semantics=("parallel",),  # megacore sharding (v7x)
                vmem_limit_bytes=vmem_limit,
            ),
        )(*args)

    try:
        return run(single_buffer=True)
    except Exception:
        # pipeline_mode=pl.Buffered(1) is not supported on every jax version;
        # fall back to default double-buffered resident weights.
        return run(single_buffer=False)


# --------------------------------------------------------------------------- #
# Parameter setup / forward (mirrors the PyTorch MLP module)
# --------------------------------------------------------------------------- #
def init_mlp_params(key, input_dim, hidden_dim, output_dim, num_layers):
    """nn.Linear shapes: weight (out, in), bias (out,); PyTorch-style
    uniform(-1/sqrt(in), 1/sqrt(in)) init, deterministic via PRNGKey."""
    h = [hidden_dim] * (num_layers - 1)
    dims_in = [input_dim] + h
    dims_out = h + [output_dim]
    params = []
    for n_in, n_out in zip(dims_in, dims_out):
        key, kw, kb = jax.random.split(key, 3)
        bound = 1.0 / (n_in ** 0.5)
        w = jax.random.uniform(kw, (n_out, n_in), jnp.float32, -bound, bound)
        b = jax.random.uniform(kb, (n_out,), jnp.float32, -bound, bound)
        params.append((w, b))
    return params


def prepare_mlp_params(params, compute_dtype=jnp.bfloat16):
    """One-time setup: transpose each weight to (in, out) and zero-pad ONLY to
    (round_up(in,128), round_up(out,128)); biases to (1, round_up(out,128)) f32.

    compute_dtype=bf16 is the recommended default on all TPU generations
    (weight HBM bytes halve; accumulation stays f32 inside the kernel);
    pass jnp.float32 for exact nn.Linear-default numerics.
    """
    ws, bs = [], []
    for w, b in params:
        n_out, n_in = w.shape
        kp = _round_up(max(n_in, 1), 128)
        np_ = _round_up(max(n_out, 1), 128)
        wp = jnp.zeros((kp, np_), compute_dtype).at[:n_in, :n_out].set(
            w.T.astype(compute_dtype))
        bp = jnp.zeros((1, np_), jnp.float32).at[0, :n_out].set(b.astype(jnp.float32))
        ws.append(wp)
        bs.append(bp)
    return {"w": ws, "b": bs,
            "in_dim": params[0][0].shape[1], "out_dim": params[-1][0].shape[0]}


def mlp_forward(prepared, x):
    ws, bs = prepared["w"], prepared["b"]
    in_dim, out_dim = prepared["in_dim"], prepared["out_dim"]
    assert x.shape[-1] == in_dim
    lead = x.shape[:-1]
    x2 = x.reshape(-1, in_dim)
    M = x2.shape[0]
    K0 = ws[0].shape[0]

    # Batch tiling: 256-row tiles fill the 2x256x256 MXU on v6e/v7x and halve
    # grid steps; 128 for mid-size batches; sublane multiple for tiny batches.
    M8 = _round_up(max(M, 1), 8)
    if M8 >= 256:
        tm = 256
    elif M8 >= 128:
        tm = 128
    else:
        tm = M8
    M_pad = _round_up(M8, tm)

    x_pad = jnp.pad(x2, ((0, M_pad - M), (0, K0 - in_dim))).astype(ws[0].dtype)
    out_pad = _fused_mlp_call(x_pad, ws, bs, tm=tm, out_dtype=x.dtype)
    return out_pad[:M, :out_dim].reshape(*lead, out_dim)


def mlp_reference(params, x):
    """Plain-JAX reference (HIGHEST-precision matmuls as ground truth)."""
    for i, (w, b) in enumerate(params):
        x = jnp.dot(x, w.T, precision=jax.lax.Precision.HIGHEST) + b
        if i < len(params) - 1:
            x = jnp.maximum(x, 0.0)
    return x


def _assert_close(out, ref, tol, name):
    err = float(jnp.max(jnp.abs(out - ref)))
    scale = max(float(jnp.max(jnp.abs(ref))), 1e-3)
    assert err <= tol * scale, f"{name}: max|err|={err} vs scale={scale} (tol={tol})"


if __name__ == "__main__":
    input_dim, hidden_dim, output_dim, num_layers = 32, 64, 16, 3
    batch = 8

    key = jax.random.PRNGKey(0)
    kx, kp = jax.random.split(key)
    x = jax.random.normal(kx, (batch, input_dim), jnp.float32)
    params = init_mlp_params(kp, input_dim, hidden_dim, output_dim, num_layers)
    ref = mlp_reference(params, x)

    # f32 path: module-default numerics (tolerance covers MXU matmul precision).
    prep_f32 = prepare_mlp_params(params, compute_dtype=jnp.float32)
    out = jax.block_until_ready(mlp_forward(prep_f32, x))
    assert out.shape == (batch, output_dim)
    _assert_close(out, ref, tol=0.05, name="f32")

    # bf16 MXU-input path (recommended perf path on v5e/v6e/v7x); f32 accumulation.
    prep_bf16 = prepare_mlp_params(params)  # default compute_dtype = bf16
    out_bf16 = jax.block_until_ready(mlp_forward(prep_bf16, x))
    assert out_bf16.shape == (batch, output_dim)
    _assert_close(out_bf16, ref, tol=0.15, name="bf16")

    print("KERNEL_OK")
</pallas_src>

<mosaic_0001>
module attributes {stable_mosaic.version = 11 : i64} {
  func.func @_fused_mlp_kernel(%arg0: i32, %arg1: memref<8x128xf32, #tpu.memory_space<vmem>>, %arg2: memref<128x128xf32, #tpu.memory_space<vmem>>, %arg3: memref<1x128xf32, #tpu.memory_space<vmem>>, %arg4: memref<128x128xf32, #tpu.memory_space<vmem>>, %arg5: memref<1x128xf32, #tpu.memory_space<vmem>>, %arg6: memref<128x128xf32, #tpu.memory_space<vmem>>, %arg7: memref<1x128xf32, #tpu.memory_space<vmem>>, %arg8: memref<8x128xf32, #tpu.memory_space<vmem>>) attributes {dimension_semantics = [#tpu.dimension_semantics<parallel>], iteration_bounds = array<i64: 1>, scalar_prefetch = 0 : i64, scratch_operands = 0 : i64, tpu.core_type = #tpu.core_type<tc>, window_params = [{transform_indices = @transform_0, window_bounds = array<i64: 8, 128>}, {pipeline_mode = #tpu.pipeline_mode<synchronous>, transform_indices = @transform_1, window_bounds = array<i64: 128, 128>}, {pipeline_mode = #tpu.pipeline_mode<synchronous>, transform_indices = @transform_2, window_bounds = array<i64: 1, 128>}, {pipeline_mode = #tpu.pipeline_mode<synchronous>, transform_indices = @transform_3, window_bounds = array<i64: 128, 128>}, {pipeline_mode = #tpu.pipeline_mode<synchronous>, transform_indices = @transform_4, window_bounds = array<i64: 1, 128>}, {pipeline_mode = #tpu.pipeline_mode<synchronous>, transform_indices = @transform_5, window_bounds = array<i64: 128, 128>}, {pipeline_mode = #tpu.pipeline_mode<synchronous>, transform_indices = @transform_6, window_bounds = array<i64: 1, 128>}, {transform_indices = @transform_7, window_bounds = array<i64: 8, 128>}]} {
    %c0 = arith.constant 0 : index
    %c0_0 = arith.constant 0 : index
    %0 = vector.load %arg1[%c0, %c0_0] : memref<8x128xf32, #tpu.memory_space<vmem>>, vector<8x128xf32>
    %c0_1 = arith.constant 0 : index
    %c0_2 = arith.constant 0 : index
    %1 = vector.load %arg2[%c0_1, %c0_2] : memref<128x128xf32, #tpu.memory_space<vmem>>, vector<128x128xf32>
    %cst = arith.constant dense<0.000000e+00> : vector<8x128xf32>
    %2 = tpu.matmul %0, %1, %cst {dimension_numbers = #tpu.dot_dimension_numbers<[1], [0], [0], [1], [0, 0, 1, 1], [], []>} : vector<8x128xf32>, vector<128x128xf32>, vector<8x128xf32> -> vector<8x128xf32>
    %c0_3 = arith.constant 0 : index
    %c0_4 = arith.constant 0 : index
    %3 = vector.load %arg3[%c0_3, %c0_4] : memref<1x128xf32, #tpu.memory_space<vmem>>, vector<1x128xf32>
    %4 = vector.broadcast %3 : vector<1x128xf32> to vector<8x128xf32>
    %5 = arith.addf %2, %4 : vector<8x128xf32>
    %cst_5 = arith.constant 0.000000e+00 : f32
    %6 = vector.broadcast %cst_5 : f32 to vector<8x128xf32>
    %7 = arith.maximumf %5, %6 : vector<8x128xf32>
    %c0_6 = arith.constant 0 : index
    %c0_7 = arith.constant 0 : index
    %8 = vector.load %arg4[%c0_6, %c0_7] : memref<128x128xf32, #tpu.memory_space<vmem>>, vector<128x128xf32>
    %cst_8 = arith.constant dense<0.000000e+00> : vector<8x128xf32>
    %9 = tpu.matmul %7, %8, %cst_8 {dimension_numbers = #tpu.dot_dimension_numbers<[1], [0], [0], [1], [0, 0, 1, 1], [], []>} : vector<8x128xf32>, vector<128x128xf32>, vector<8x128xf32> -> vector<8x128xf32>
    %c0_9 = arith.constant 0 : index
    %c0_10 = arith.constant 0 : index
    %10 = vector.load %arg5[%c0_9, %c0_10] : memref<1x128xf32, #tpu.memory_space<vmem>>, vector<1x128xf32>
    %11 = vector.broadcast %10 : vector<1x128xf32> to vector<8x128xf32>
    %12 = arith.addf %9, %11 : vector<8x128xf32>
    %cst_11 = arith.constant 0.000000e+00 : f32
    %13 = vector.broadcast %cst_11 : f32 to vector<8x128xf32>
    %14 = arith.maximumf %12, %13 : vector<8x128xf32>
    %c0_12 = arith.constant 0 : index
    %c0_13 = arith.constant 0 : index
    %15 = vector.load %arg6[%c0_12, %c0_13] : memref<128x128xf32, #tpu.memory_space<vmem>>, vector<128x128xf32>
    %cst_14 = arith.constant dense<0.000000e+00> : vector<8x128xf32>
    %16 = tpu.matmul %14, %15, %cst_14 {dimension_numbers = #tpu.dot_dimension_numbers<[1], [0], [0], [1], [0, 0, 1, 1], [], []>} : vector<8x128xf32>, vector<128x128xf32>, vector<8x128xf32> -> vector<8x128xf32>
    %c0_15 = arith.constant 0 : index
    %c0_16 = arith.constant 0 : index
    %17 = vector.load %arg7[%c0_15, %c0_16] : memref<1x128xf32, #tpu.memory_space<vmem>>, vector<1x128xf32>
    %18 = vector.broadcast %17 : vector<1x128xf32> to vector<8x128xf32>
    %19 = arith.addf %16, %18 : vector<8x128xf32>
    %c0_17 = arith.constant 0 : index
    %c0_18 = arith.constant 0 : index
    %20 = vector.load %arg8[%c0_17, %c0_18] : memref<8x128xf32, #tpu.memory_space<vmem>>, vector<8x128xf32>
    tpu.vector_store %arg8[%c0_17, %c0_18], %19 {strides = array<i32>} : memref<8x128xf32, #tpu.memory_space<vmem>>, vector<8x128xf32>,
    return
  }
  func.func @transform_0(%arg0: i32) -> (i32, i32) {
    %c0_i32 = arith.constant 0 : i32
    %c0_i32_0 = arith.constant 0 : i32
    return %arg0, %c0_i32 : i32, i32
  }
  func.func @transform_1(%arg0: i32) -> (i32, i32) {
    %c0_i32 = arith.constant 0 : i32
    %c0_i32_0 = arith.constant 0 : i32
    %c0_i32_1 = arith.constant 0 : i32
    return %c0_i32, %c0_i32_0 : i32, i32
  }
  func.func @transform_2(%arg0: i32) -> (i32, i32) {
    %c0_i32 = arith.constant 0 : i32
    %c0_i32_0 = arith.constant 0 : i32
    %c0_i32_1 = arith.constant 0 : i32
    return %c0_i32, %c0_i32_0 : i32, i32
  }
  func.func @transform_3(%arg0: i32) -> (i32, i32) {
    %c0_i32 = arith.constant 0 : i32
    %c0_i32_0 = arith.constant 0 : i32
    %c0_i32_1 = arith.constant 0 : i32
    return %c0_i32, %c0_i32_0 : i32, i32
  }
  func.func @transform_4(%arg0: i32) -> (i32, i32) {
    %c0_i32 = arith.constant 0 : i32
    %c0_i32_0 = arith.constant 0 : i32
    %c0_i32_1 = arith.constant 0 : i32
    return %c0_i32, %c0_i32_0 : i32, i32
  }
  func.func @transform_5(%arg0: i32) -> (i32, i32) {
    %c0_i32 = arith.constant 0 : i32
    %c0_i32_0 = arith.constant 0 : i32
    %c0_i32_1 = arith.constant 0 : i32
    return %c0_i32, %c0_i32_0 : i32, i32
  }
  func.func @transform_6(%arg0: i32) -> (i32, i32) {
    %c0_i32 = arith.constant 0 : i32
    %c0_i32_0 = arith.constant 0 : i32
    %c0_i32_1 = arith.constant 0 : i32
    return %c0_i32, %c0_i32_0 : i32, i32
  }
  func.func @transform_7(%arg0: i32) -> (i32, i32) {
    %c0_i32 = arith.constant 0 : i32
    %c0_i32_0 = arith.constant 0 : i32
    return %arg0, %c0_i32 : i32, i32
  }
}

module attributes {stable_mosaic.version = 11 : i64} {
  func.func @_fused_mlp_kernel(%arg0: i32, %arg1: memref<8x128xf32, #tpu.memory_space<vmem>>, %arg2: memref<128x128xf32, #tpu.memory_space<vmem>>, %arg3: memref<1x128xf32, #tpu.memory_space<vmem>>, %arg4: memref<128x128xf32, #tpu.memory_space<vmem>>, %arg5: memref<1x128xf32, #tpu.memory_space<vmem>>, %arg6: memref<128x128xf32, #tpu.memory_space<vmem>>, %arg7: memref<1x128xf32, #tpu.memory_space<vmem>>, %arg8: memref<8x128xf32, #tpu.memory_space<vmem>>) attributes {dimension_semantics = [#tpu.dimension_semantics<parallel>], iteration_bounds = array<i64: 1>, scalar_prefetch = 0 : i64, scratch_operands = 0 : i64, tpu.core_type = #tpu.core_type<tc>, window_params = [{transform_indices = @transform_0, window_bounds = array<i64: 8, 128>}, {pipeline_mode = #tpu.pipeline_mode<synchronous>, transform_indices = @transform_1, window_bounds = array<i64: 128, 128>}, {pipeline_mode = #tpu.pipeline_mode<synchronous>, transform_indices = @transform_2, window_bounds = array<i64: 1, 128>}, {pipeline_mode = #tpu.pipeline_mode<synchronous>, transform_indices = @transform_3, window_bounds = array<i64: 128, 128>}, {pipeline_mode = #tpu.pipeline_mode<synchronous>, transform_indices = @transform_4, window_bounds = array<i64: 1, 128>}, {pipeline_mode = #tpu.pipeline_mode<synchronous>, transform_indices = @transform_5, window_bounds = array<i64: 128, 128>}, {pipeline_mode = #tpu.pipeline_mode<synchronous>, transform_indices = @transform_6, window_bounds = array<i64: 1, 128>}, {transform_indices = @transform_7, window_bounds = array<i64: 8, 128>}]} {
    %c0 = arith.constant 0 : index
    %c0_0 = arith.constant 0 : index
    %0 = vector.load %arg1[%c0, %c0_0] : memref<8x128xf32, #tpu.memory_space<vmem>>, vector<8x128xf32>
    %c0_1 = arith.constant 0 : index
    %c0_2 = arith.constant 0 : index
    %1 = vector.load %arg2[%c0_1, %c0_2] : memref<128x128xf32, #tpu.memory_space<vmem>>, vector<128x128xf32>
    %cst = arith.constant dense<0.000000e+00> : vector<8x128xf32>
    %2 = tpu.matmul %0, %1, %cst {dimension_numbers = #tpu.dot_dimension_numbers<[1], [0], [0], [1], [0, 0, 1, 1], [], []>} : vector<8x128xf32>, vector<128x128xf32>, vector<8x128xf32> -> vector<8x128xf32>
    %c0_3 = arith.constant 0 : index
    %c0_4 = arith.constant 0 : index
    %3 = vector.load %arg3[%c0_3, %c0_4] : memref<1x128xf32, #tpu.memory_space<vmem>>, vector<1x128xf32>
    %4 = vector.broadcast %3 : vector<1x128xf32> to vector<8x128xf32>
    %5 = arith.addf %2, %4 : vector<8x128xf32>
    %cst_5 = arith.constant 0.000000e+00 : f32
    %6 = vector.broadcast %cst_5 : f32 to vector<8x128xf32>
    %7 = arith.maximumf %5, %6 : vector<8x128xf32>
    %c0_6 = arith.constant 0 : index
    %c0_7 = arith.constant 0 : index
    %8 = vector.load %arg4[%c0_6, %c0_7] : memref<128x128xf32, #tpu.memory_space<vmem>>, vector<128x128xf32>
    %cst_8 = arith.constant dense<0.000000e+00> : vector<8x128xf32>
    %9 = tpu.matmul %7, %8, %cst_8 {dimension_numbers = #tpu.dot_dimension_numbers<[1], [0], [0], [1], [0, 0, 1, 1], [], []>} : vector<8x128xf32>, vector<128x128xf32>, vector<8x128xf32> -> vector<8x128xf32>
    %c0_9 = arith.constant 0 : index
    %c0_10 = arith.constant 0 : index
    %10 = vector.load %arg5[%c0_9, %c0_10] : memref<1x128xf32, #tpu.memory_space<vmem>>, vector<1x128xf32>
    %11 = vector.broadcast %10 : vector<1x128xf32> to vector<8x128xf32>
    %12 = arith.addf %9, %11 : vector<8x128xf32>
    %cst_11 = arith.constant 0.000000e+00 : f32
    %13 = vector.broadcast %cst_11 : f32 to vector<8x128xf32>
    %14 = arith.maximumf %12, %13 : vector<8x128xf32>
    %c0_12 = arith.constant 0 : index
    %c0_13 = arith.constant 0 : index
    %15 = vector.load %arg6[%c0_12, %c0_13] : memref<128x128xf32, #tpu.memory_space<vmem>>, vector<128x128xf32>
    %cst_14 = arith.constant dense<0.000000e+00> : vector<8x128xf32>
    %16 = tpu.matmul %14, %15, %cst_14 {dimension_numbers = #tpu.dot_dimension_numbers<[1], [0], [0], [1], [0, 0, 1, 1], [], []>} : vector<8x128xf32>, vector<128x128xf32>, vector<8x128xf32> -> vector<8x128xf32>
    %c0_15 = arith.constant 0 : index
    %c0_16 = arith.constant 0 : index
    %17 = vector.load %arg7[%c0_15, %c0_16] : memref<1x128xf32, #tpu.memory_space<vmem>>, vector<1x128xf32>
    %18 = vector.broadcast %17 : vector<1x128xf32> to vector<8x128xf32>
    %19 = arith.addf %16, %18 : vector<8x128xf32>
    %c0_17 = arith.constant 0 : index
    %c0_18 = arith.constant 0 : index
    %20 = vector.load %arg8[%c0_17, %c0_18] : memref<8x128xf32, #tpu.memory_space<vmem>>, vector<8x128xf32>
    tpu.vector_store %arg8[%c0_17, %c0_18], %19 {strides = array<i32>} : memref<8x128xf32, #tpu.memory_space<vmem>>, vector<8x128xf32>,
    return
  }
  func.func @transform_0(%arg0: i32) -> (i32, i32) {
    %c0_i32 = arith.constant 0 : i32
    %c0_i32_0 = arith.constant 0 : i32
    return %arg0, %c0_i32 : i32, i32
  }
  func.func @transform_1(%arg0: i32) -> (i32, i32) {
    %c0_i32 = arith.constant 0 : i32
    %c0_i32_0 = arith.constant 0 : i32
    %c0_i32_1 = arith.constant 0 : i32
    return %c0_i32, %c0_i32_0 : i32, i32
  }
  func.func @transform_2(%arg0: i32) -> (i32, i32) {
    %c0_i32 = arith.constant 0 : i32
    %c0_i32_0 = arith.constant 0 : i32
    %c0_i32_1 = arith.constant 0 : i32
    return %c0_i32, %c0_i32_0 : i32, i32
  }
  func.func @transform_3(%arg0: i32) -> (i32, i32) {
    %c0_i32 = arith.constant 0 : i32
    %c0_i32_0 = arith.constant 0 : i32
    %c0_i32_1 = arith.constant 0 : i32
    return %c0_i32, %c0_i32_0 : i32, i32
  }
  func.func @transform_4(%arg0: i32) -> (i32, i32) {
    %c0_i32 = arith.constant 0 : i32
    %c0_i32_0 = arith.constant 0 : i32
    %c0_i32_1 = arith.constant 0 : i32
    return %c0_i32, %c0_i32_0 : i32, i32
  }
  func.func @transform_5(%arg0: i32) -> (i32, i32) {
    %c0_i32 = arith.constant 0 : i32
    %c0_i32_0 = arith.constant 0 : i32
    %c0_i32_1 = arith.constant 0 : i32
    return %c0_i32, %c0_i32_0 : i32, i32
  }
  func.func @transform_6(%arg0: i32) -> (i32, i32) {
    %c0_i32 = arith.constant 0 : i32
    %c0_i32_0 = arith.constant 0 : i32
    %c0_i32_1 = arith.constant 0 : i32
    return %c0_i32, %c0_i32_0 : i32, i32
  }
  func.func @transform_7(%arg0: i32) -> (i32, i32) {
    %c0_i32 = arith.constant 0 : i32
    %c0_i32_0 = arith.constant 0 : i32
    return %arg0, %c0_i32 : i32, i32
  }
}

</mosaic_0001>

<llo_original>
// kernel: tpu_custom_call.1
$region0: #{tpu_custom_call.1}
  #allocation0 [shape = 'u32[]', space=smem, size = 0x4, offset = 0x4, fixed_abs, tag = 'smem constant byte address 0x4 - core index']
  #allocation1 [shape = 'u32[144,128]{1,0:T(1,128)}', space=vmem, size = 0x12000, scoped, tag = 'internal scratch']
  %s0 = inlined_call_operand.hbm [shape: f32[8,128], index: 0, kind: input, shape index: {}]
  %s1 = inlined_call_operand.hbm [shape: f32[128,128], index: 1, kind: input, shape index: {}]
  %s2 = inlined_call_operand.vmem [shape: f32[1,128], index: 2, kind: input, shape index: {}]
  %s3 = inlined_call_operand.hbm [shape: f32[128,128], index: 3, kind: input, shape index: {}]
  %s4 = inlined_call_operand.vmem [shape: f32[1,128], index: 4, kind: input, shape index: {}]
  %s5 = inlined_call_operand.hbm [shape: f32[128,128], index: 5, kind: input, shape index: {}]
  %s6 = inlined_call_operand.vmem [shape: f32[1,128], index: 6, kind: input, shape index: {}]
  %s7 = inlined_call_operand.hbm [shape: f32[8,128], index: 7, kind: output, shape index: {}]
  %s8 = sld [smem:[#allocation0]]
  $region54: #{tpu_custom_call.1} parent=0
    _
  %s10 = ssub.s32 1, %s8
  %s11 = scalar_select 0, %s10, %s8
  $region1: #{tpu_custom_call.1} parent=0
    #allocation2 [shape = 'u8[4096]{0}', space=vmem, size = 0x1000, scoped, tag = 'input window, operand 0, single buffered']
    #allocation3 [shape = 's32[1]{0}', space=sflag, size = 0x4, scoped, tag = 'scoped memory for tpu_custom_call.1']
    #allocation4 [shape = 's32[1]{0}', space=sflag, size = 0x4, scoped, tag = 'scoped memory for tpu_custom_call.1']
    #allocation5 [shape = 'u8[65536]{0}', space=vmem, size = 0x10000, scoped, tag = 'input window, operand 1, single buffered']
    #allocation6 [shape = 's32[1]{0}', space=sflag, size = 0x4, scoped, tag = 'scoped memory for tpu_custom_call.1']
    #allocation7 [shape = 'u8[65536]{0}', space=vmem, size = 0x10000, scoped, tag = 'input window, operand 3, single buffered']
    #allocation8 [shape = 'u8[65536]{0}', space=vmem, size = 0x10000, scoped, tag = 'input window, operand 5, single buffered']
    #allocation9 [shape = 's32[1]{0}', space=sflag, size = 0x4, scoped, tag = 'scoped memory for tpu_custom_call.1']
    #allocation10 [shape = 'u8[4096]{0}', space=vmem, size = 0x1000, scoped, tag = 'output window, operand 0, single buffered']
    %12 = vsyncpa [#allocation3], 0
    %13 = vsyncpa [#allocation6], 0
    %14 = vsyncpa [#allocation9], 0
    %15 = vsyncpa [#allocation4], 0
    // Predicated region
    $region2: #{tpu_custom_call.1} parent=1 // pred_check
      _
    $region3: #{tpu_custom_call.1} parent=1 // pred_check_branch
      %17 = sbr.rel (0) target = $region5
    $region4: #{tpu_custom_call.1} parent=1 // pred_region
      %s19 = ssub.s32 128, 128
      %20 = vsyncadd [#allocation3], %s19
      %s22 = sshll.u32 [#allocation2], 4
      %s23 = int_to_ptr.vmem [resolvable:$true] %s22
      %25 = dma.hbm_to_vmem [thread:$0]  %s0, 128, %s23, [#allocation3]
    $region5: #{tpu_custom_call.1} parent=1 // pred_fallthru
      _
    // Predicated region
    $region6: #{tpu_custom_call.1} parent=1 // pred_check
      _
    $region7: #{tpu_custom_call.1} parent=1 // pred_check_branch
      %27 = sbr.rel (0) target = $region9
    $region8: #{tpu_custom_call.1} parent=1 // pred_region
      %s29 = ssub.s32 2048, 2048
      %30 = vsyncadd [#allocation6], %s29
      %s31 = sshll.u32 [#allocation5], 4
      %s32 = int_to_ptr.vmem [resolvable:$true] %s31
      %37 = dma.hbm_to_vmem [thread:$0]  %s1, 2048, %s32, [#allocation6], 128, 128, 8
    $region9: #{tpu_custom_call.1} parent=1 // pred_fallthru
      _
    // Predicated region
    $region10: #{tpu_custom_call.1} parent=1 // pred_check
      _
    $region11: #{tpu_custom_call.1} parent=1 // pred_check_branch
      %39 = sbr.rel (0) target = $region13
    $region12: #{tpu_custom_call.1} parent=1 // pred_region
      _
    $region13: #{tpu_custom_call.1} parent=1 // pred_fallthru
      _
    // Predicated region
    $region14: #{tpu_custom_call.1} parent=1 // pred_check
      _
    $region15: #{tpu_custom_call.1} parent=1 // pred_check_branch
      %41 = sbr.rel (0) target = $region17
    $region16: #{tpu_custom_call.1} parent=1 // pred_region
      %s43 = ssub.s32 2048, 2048
      %44 = vsyncadd [#allocation6], %s43
      %s45 = sshll.u32 [#allocation7], 4
      %s46 = int_to_ptr.vmem [resolvable:$true] %s45
      %51 = dma.hbm_to_vmem [thread:$0]  %s3, 2048, %s46, [#allocation6], 128, 128, 8
    $region17: #{tpu_custom_call.1} parent=1 // pred_fallthru
      _
    // Predicated region
    $region18: #{tpu_custom_call.1} parent=1 // pred_check
      _
    $region19: #{tpu_custom_call.1} parent=1 // pred_check_branch
      %53 = sbr.rel (0) target = $region21
    $region20: #{tpu_custom_call.1} parent=1 // pred_region
      _
    $region21: #{tpu_custom_call.1} parent=1 // pred_fallthru
      _
    // Predicated region
    $region22: #{tpu_custom_call.1} parent=1 // pred_check
      _
    $region23: #{tpu_custom_call.1} parent=1 // pred_check_branch
      %55 = sbr.rel (0) target = $region25
    $region24: #{tpu_custom_call.1} parent=1 // pred_region
      %s57 = ssub.s32 2048, 2048
      %58 = vsyncadd [#allocation9], %s57
      %s59 = sshll.u32 [#allocation8], 4
      %s60 = int_to_ptr.vmem [resolvable:$true] %s59
      %65 = dma.hbm_to_vmem [thread:$0]  %s5, 2048, %s60, [#allocation9], 128, 128, 8
    $region25: #{tpu_custom_call.1} parent=1 // pred_fallthru
      _
    // Predicated region
    $region26: #{tpu_custom_call.1} parent=1 // pred_check
      _
    $region27: #{tpu_custom_call.1} parent=1 // pred_check_branch
      %67 = sbr.rel (0) target = $region29
    $region28: #{tpu_custom_call.1} parent=1 // pred_region
      _
    $region29: #{tpu_custom_call.1} parent=1 // pred_fallthru
      _
    // Predicated region
    $region30: #{tpu_custom_call.1} parent=1 // pred_check
      _
    $region31: #{tpu_custom_call.1} parent=1 // pred_check_branch
      %69 = sbr.rel (0) target = $region33
    $region32: #{tpu_custom_call.1} parent=1 // pred_region
      %70 = dma.done [#allocation3], 128
    $region33: #{tpu_custom_call.1} parent=1 // pred_fallthru
      _
    // Predicated region
    $region34: #{tpu_custom_call.1} parent=1 // pred_check
      _
    $region35: #{tpu_custom_call.1} parent=1 // pred_check_branch
      %72 = sbr.rel (0) target = $region37
    $region36: #{tpu_custom_call.1} parent=1 // pred_region
      %73 = dma.done [#allocation6], 2048
    $region37: #{tpu_custom_call.1} parent=1 // pred_fallthru
      _
    // Predicated region
    $region38: #{tpu_custom_call.1} parent=1 // pred_check
      _
    $region39: #{tpu_custom_call.1} parent=1 // pred_check_branch
      %75 = sbr.rel (0) target = $region41
    $region40: #{tpu_custom_call.1} parent=1 // pred_region
      %76 = dma.done [#allocation6], 2048
    $region41: #{tpu_custom_call.1} parent=1 // pred_fallthru
      _
    // Predicated region
    $region42: #{tpu_custom_call.1} parent=1 // pred_check
      _
    $region43: #{tpu_custom_call.1} parent=1 // pred_check_branch
      %78 = sbr.rel (0) target = $region45
    $region44: #{tpu_custom_call.1} parent=1 // pred_region
      %79 = dma.done [#allocation9], 2048
    $region45: #{tpu_custom_call.1} parent=1 // pred_fallthru
      _
    %v80 = vld [vmem:[#allocation2] sm:$0xff]
    %v81 = vld [vmem:[#allocation5] sm:$0xff]
    %v82 = vld [vmem:[#allocation5 + $0x8] sm:$0xff]
    %v83 = vld [vmem:[#allocation5 + $0x10] sm:$0xff]
    %v84 = vld [vmem:[#allocation5 + $0x18] sm:$0xff]
    %v85 = vld [vmem:[#allocation5 + $0x20] sm:$0xff]
    %v86 = vld [vmem:[#allocation5 + $0x28] sm:$0xff]
    %v87 = vld [vmem:[#allocation5 + $0x30] sm:$0xff]
    %v88 = vld [vmem:[#allocation5 + $0x38] sm:$0xff]
    %v89 = vld [vmem:[#allocation5 + $0x40] sm:$0xff]
    %v90 = vld [vmem:[#allocation5 + $0x48] sm:$0xff]
    %v91 = vld [vmem:[#allocation5 + $0x50] sm:$0xff]
    %v92 = vld [vmem:[#allocation5 + $0x58] sm:$0xff]
    %v93 = vld [vmem:[#allocation5 + $0x60] sm:$0xff]
    %v94 = vld [vmem:[#allocation5 + $0x68] sm:$0xff]
    %v95 = vld [vmem:[#allocation5 + $0x70] sm:$0xff]
    %v96 = vld [vmem:[#allocation5 + $0x78] sm:$0xff]
    %v97 = vld [vmem:[%s2] sm:$0x1]
    %v99 = vlaneseq
    %v100 = vshrl.u32 %v99, 7
    %v101 = vsub.s32 0, %v100
    %v102 = vrot.slane %v97, %v101
    %104 = vmatprep.subr.mxu0 0.0
    %105 = vmatpush1.msra.mxu0 %v96
    %106 = vmatprep.subr.mxu0 0.0
    %107 = vmatpush1.msra.mxu0 %v95
    %108 = vmatprep.subr.mxu0 0.0
    %109 = vmatpush1.msra.mxu0 %v94
    %110 = vmatprep.subr.mxu0 0.0
    %111 = vmatpush1.msra.mxu0 %v93
    %112 = vmatprep.subr.mxu0 0.0
    %113 = vmatpush1.msra.mxu0 %v92
    %114 = vmatprep.subr.mxu0 0.0
    %115 = vmatpush1.msra.mxu0 %v91
    %116 = vmatprep.subr.mxu0 0.0
    %117 = vmatpush1.msra.mxu0 %v90
    %118 = vmatprep.subr.mxu0 0.0
    %119 = vmatpush1.msra.mxu0 %v89
    %120 = vmatprep.subr.mxu0 0.0
    %121 = vmatpush1.msra.mxu0 %v88
    %122 = vmatprep.subr.mxu0 0.0
    %123 = vmatpush1.msra.mxu0 %v87
    %124 = vmatprep.subr.mxu0 0.0
    %125 = vmatpush1.msra.mxu0 %v86
    %126 = vmatprep.subr.mxu0 0.0
    %127 = vmatpush1.msra.mxu0 %v85
    %128 = vmatprep.subr.mxu0 0.0
    %129 = vmatpush1.msra.mxu0 %v84
    %130 = vmatprep.subr.mxu0 0.0
    %131 = vmatpush1.msra.mxu0 %v83
    %132 = vmatprep.subr.mxu0 0.0
    %133 = vmatpush1.msra.mxu0 %v82
    %134 = vmatprep.subr.mxu0 0.0
    %135 = vmatpush1.msra.mxu0 %v81
    %136 = vmatprep.subr.mxu0 0.0
    %137 = vmatpush2.msra.mxu0 0.0
    %138 = vmatprep.subr.mxu0 0.0
    %139 = vmatpush2.msra.mxu0 0.0
    %140 = vmatprep.subr.mxu0 0.0
    %141 = vmatpush2.msra.mxu0 0.0
    %142 = vmatprep.subr.mxu0 0.0
    %143 = vmatpush2.msra.mxu0 0.0
    %144 = vmatprep.subr.mxu0 0.0
    %145 = vmatpush2.msra.mxu0 0.0
    %146 = vmatprep.subr.mxu0 0.0
    %147 = vmatpush2.msra.mxu0 0.0
    %148 = vmatprep.subr.mxu0 0.0
    %149 = vmatpush2.msra.mxu0 0.0
    %150 = vmatprep.subr.mxu0 0.0
    %151 = vmatpush2.msra.mxu0 0.0
    %152 = vmatprep.subr.mxu0 0.0
    %153 = vmatpush2.msra.mxu0 0.0
    %154 = vmatprep.subr.mxu0 0.0
    %155 = vmatpush2.msra.mxu0 0.0
    %156 = vmatprep.subr.mxu0 0.0
    %157 = vmatpush2.msra.mxu0 0.0
    %158 = vmatprep.subr.mxu0 0.0
    %159 = vmatpush2.msra.mxu0 0.0
    %160 = vmatprep.subr.mxu0 0.0
    %161 = vmatpush2.msra.mxu0 0.0
    %162 = vmatprep.subr.mxu0 0.0
    %163 = vmatpush2.msra.mxu0 0.0
    %164 = vmatprep.subr.mxu0 0.0
    %165 = vmatpush2.msra.mxu0 0.0
    %166 = vmatprep.subr.mxu0 0.0
    %167 = vmatpush2.msra.mxu0 0.0
    %168 = vmatprep.mubr.f32.mxu0 0.0
    %169 = vmatmul.mubr.f32.gmra.mxu0 %v80
    %v170 = vpop.f32.mrf.mxu0
    %v171 = vadd.f32 %v102, %v170
    %v172 = vpop.f32.mrf.mxu0
    %173 = vdwg.mxu0
    %v174 = vmax.f32 %v171, 0.0
    %v175 = vld [vmem:[#allocation7] sm:$0xff]
    %v176 = vld [vmem:[#allocation7 + $0x8] sm:$0xff]
    %v177 = vld [vmem:[#allocation7 + $0x10] sm:$0xff]
    %v178 = vld [vmem:[#allocation7 + $0x18] sm:$0xff]
    %v179 = vld [vmem:[#allocation7 + $0x20] sm:$0xff]
    %v180 = vld [vmem:[#allocation7 + $0x28] sm:$0xff]
    %v181 = vld [vmem:[#allocation7 + $0x30] sm:$0xff]
    %v182 = vld [vmem:[#allocation7 + $0x38] sm:$0xff]
    %v183 = vld [vmem:[#allocation7 + $0x40] sm:$0xff]
    %v184 = vld [vmem:[#allocation7 + $0x48] sm:$0xff]
    %v185 = vld [vmem:[#allocation7 + $0x50] sm:$0xff]
    %v186 = vld [vmem:[#allocation7 + $0x58] sm:$0xff]
    %v187 = vld [vmem:[#allocation7 + $0x60] sm:$0xff]
    %v188 = vld [vmem:[#allocation7 + $0x68] sm:$0xff]
    %v189 = vld [vmem:[#allocation7 + $0x70] sm:$0xff]
    %v190 = vld [vmem:[#allocation7 + $0x78] sm:$0xff]
    %v191 = vld [vmem:[%s4] sm:$0x1]
    %v193 = vlaneseq
    %v194 = vshrl.u32 %v193, 7
    %v195 = vsub.s32 0, %v194
    %v196 = vrot.slane %v191, %v195
    %198 = vmatprep.subr.mxu0 0.0
    %199 = vmatpush1.msra.mxu0 %v190
    %200 = vmatprep.subr.mxu0 0.0
    %201 = vmatpush1.msra.mxu0 %v189
    %202 = vmatprep.subr.mxu0 0.0
    %203 = vmatpush1.msra.mxu0 %v188
    %204 = vmatprep.subr.mxu0 0.0
    %205 = vmatpush1.msra.mxu0 %v187
    %206 = vmatprep.subr.mxu0 0.0
    %207 = vmatpush1.msra.mxu0 %v186
    %208 = vmatprep.subr.mxu0 0.0
    %209 = vmatpush1.msra.mxu0 %v185
    %210 = vmatprep.subr.mxu0 0.0
    %211 = vmatpush1.msra.mxu0 %v184
    %212 = vmatprep.subr.mxu0 0.0
    %213 = vmatpush1.msra.mxu0 %v183
    %214 = vmatprep.subr.mxu0 0.0
    %215 = vmatpush1.msra.mxu0 %v182
    %216 = vmatprep.subr.mxu0 0.0
    %217 = vmatpush1.msra.mxu0 %v181
    %218 = vmatprep.subr.mxu0 0.0
    %219 = vmatpush1.msra.mxu0 %v180
    %220 = vmatprep.subr.mxu0 0.0
    %221 = vmatpush1.msra.mxu0 %v179
    %222 = vmatprep.subr.mxu0 0.0
    %223 = vmatpush1.msra.mxu0 %v178
    %224 = vmatprep.subr.mxu0 0.0
    %225 = vmatpush1.msra.mxu0 %v177
    %226 = vmatprep.subr.mxu0 0.0
    %227 = vmatpush1.msra.mxu0 %v176
    %228 = vmatprep.subr.mxu0 0.0
    %229 = vmatpush1.msra.mxu0 %v175
    %230 = vmatprep.subr.mxu0 0.0
    %231 = vmatpush2.msra.mxu0 0.0
    %232 = vmatprep.subr.mxu0 0.0
    %233 = vmatpush2.msra.mxu0 0.0
    %234 = vmatprep.subr.mxu0 0.0
    %235 = vmatpush2.msra.mxu0 0.0
    %236 = vmatprep.subr.mxu0 0.0
    %237 = vmatpush2.msra.mxu0 0.0
    %238 = vmatprep.subr.mxu0 0.0
    %239 = vmatpush2.msra.mxu0 0.0
    %240 = vmatprep.subr.mxu0 0.0
    %241 = vmatpush2.msra.mxu0 0.0
    %242 = vmatprep.subr.mxu0 0.0
    %243 = vmatpush2.msra.mxu0 0.0
    %244 = vmatprep.subr.mxu0 0.0
    %245 = vmatpush2.msra.mxu0 0.0
    %246 = vmatprep.subr.mxu0 0.0
    %247 = vmatpush2.msra.mxu0 0.0
    %248 = vmatprep.subr.mxu0 0.0
    %249 = vmatpush2.msra.mxu0 0.0
    %250 = vmatprep.subr.mxu0 0.0
    %251 = vmatpush2.msra.mxu0 0.0
    %252 = vmatprep.subr.mxu0 0.0
    %253 = vmatpush2.msra.mxu0 0.0
    %254 = vmatprep.subr.mxu0 0.0
    %255 = vmatpush2.msra.mxu0 0.0
    %256 = vmatprep.subr.mxu0 0.0
    %257 = vmatpush2.msra.mxu0 0.0
    %258 = vmatprep.subr.mxu0 0.0
    %259 = vmatpush2.msra.mxu0 0.0
    %260 = vmatprep.subr.mxu0 0.0
    %261 = vmatpush2.msra.mxu0 0.0
    %262 = vmatprep.mubr.f32.mxu0 0.0
    %263 = vmatmul.mubr.f32.gmra.mxu0 %v174
    %v264 = vpop.f32.mrf.mxu0
    %v265 = vadd.f32 %v196, %v264
    %v266 = vpop.f32.mrf.mxu0
    %267 = vdwg.mxu0
    %v268 = vmax.f32 %v265, 0.0
    %v269 = vld [vmem:[#allocation8] sm:$0xff]
    %v270 = vld [vmem:[#allocation8 + $0x8] sm:$0xff]
    %v271 = vld [vmem:[#allocation8 + $0x10] sm:$0xff]
    %v272 = vld [vmem:[#allocation8 + $0x18] sm:$0xff]
    %v273 = vld [vmem:[#allocation8 + $0x20] sm:$0xff]
    %v274 = vld [vmem:[#allocation8 + $0x28] sm:$0xff]
    %v275 = vld [vmem:[#allocation8 + $0x30] sm:$0xff]
    %v276 = vld [vmem:[#allocation8 + $0x38] sm:$0xff]
    %v277 = vld [vmem:[#allocation8 + $0x40] sm:$0xff]
    %v278 = vld [vmem:[#allocation8 + $0x48] sm:$0xff]
    %v279 = vld [vmem:[#allocation8 + $0x50] sm:$0xff]
    %v280 = vld [vmem:[#allocation8 + $0x58] sm:$0xff]
    %v281 = vld [vmem:[#allocation8 + $0x60] sm:$0xff]
    %v282 = vld [vmem:[#allocation8 + $0x68] sm:$0xff]
    %v283 = vld [vmem:[#allocation8 + $0x70] sm:$0xff]
    %v284 = vld [vmem:[#allocation8 + $0x78] sm:$0xff]
    %v285 = vld [vmem:[%s6] sm:$0x1]
    %v287 = vlaneseq
    %v288 = vshrl.u32 %v287, 7
    %v289 = vsub.s32 0, %v288
    %v290 = vrot.slane %v285, %v289
    %292 = vmatprep.subr.mxu0 0.0
    %293 = vmatpush1.msra.mxu0 %v284
    %294 = vmatprep.subr.mxu0 0.0
    %295 = vmatpush1.msra.mxu0 %v283
    %296 = vmatprep.subr.mxu0 0.0
    %297 = vmatpush1.msra.mxu0 %v282
    %298 = vmatprep.subr.mxu0 0.0
    %299 = vmatpush1.msra.mxu0 %v281
    %300 = vmatprep.subr.mxu0 0.0
    %301 = vmatpush1.msra.mxu0 %v280
    %302 = vmatprep.subr.mxu0 0.0
    %303 = vmatpush1.msra.mxu0 %v279
    %304 = vmatprep.subr.mxu0 0.0
    %305 = vmatpush1.msra.mxu0 %v278
    %306 = vmatprep.subr.mxu0 0.0
    %307 = vmatpush1.msra.mxu0 %v277
    %308 = vmatprep.subr.mxu0 0.0
    %309 = vmatpush1.msra.mxu0 %v276
    %310 = vmatprep.subr.mxu0 0.0
    %311 = vmatpush1.msra.mxu0 %v275
    %312 = vmatprep.subr.mxu0 0.0
    %313 = vmatpush1.msra.mxu0 %v274
    %314 = vmatprep.subr.mxu0 0.0
    %315 = vmatpush1.msra.mxu0 %v273
    %316 = vmatprep.subr.mxu0 0.0
    %317 = vmatpush1.msra.mxu0 %v272
    %318 = vmatprep.subr.mxu0 0.0
    %319 = vmatpush1.msra.mxu0 %v271
    %320 = vmatprep.subr.mxu0 0.0
    %321 = vmatpush1.msra.mxu0 %v270
    %322 = vmatprep.subr.mxu0 0.0
    %323 = vmatpush1.msra.mxu0 %v269
    %324 = vmatprep.subr.mxu0 0.0
    %325 = vmatpush2.msra.mxu0 0.0
    %326 = vmatprep.subr.mxu0 0.0
    %327 = vmatpush2.msra.mxu0 0.0
    %328 = vmatprep.subr.mxu0 0.0
    %329 = vmatpush2.msra.mxu0 0.0
    %330 = vmatprep.subr.mxu0 0.0
    %331 = vmatpush2.msra.mxu0 0.0
    %332 = vmatprep.subr.mxu0 0.0
    %333 = vmatpush2.msra.mxu0 0.0
    %334 = vmatprep.subr.mxu0 0.0
    %335 = vmatpush2.msra.mxu0 0.0
    %336 = vmatprep.subr.mxu0 0.0
    %337 = vmatpush2.msra.mxu0 0.0
    %338 = vmatprep.subr.mxu0 0.0
    %339 = vmatpush2.msra.mxu0 0.0
    %340 = vmatprep.subr.mxu0 0.0
    %341 = vmatpush2.msra.mxu0 0.0
    %342 = vmatprep.subr.mxu0 0.0
    %343 = vmatpush2.msra.mxu0 0.0
    %344 = vmatprep.subr.mxu0 0.0
    %345 = vmatpush2.msra.mxu0 0.0
    %346 = vmatprep.subr.mxu0 0.0
    %347 = vmatpush2.msra.mxu0 0.0
    %348 = vmatprep.subr.mxu0 0.0
    %349 = vmatpush2.msra.mxu0 0.0
    %350 = vmatprep.subr.mxu0 0.0
    %351 = vmatpush2.msra.mxu0 0.0
    %352 = vmatprep.subr.mxu0 0.0
    %353 = vmatpush2.msra.mxu0 0.0
    %354 = vmatprep.subr.mxu0 0.0
    %355 = vmatpush2.msra.mxu0 0.0
    %356 = vmatprep.mubr.f32.mxu0 0.0
    %357 = vmatmul.mubr.f32.gmra.mxu0 %v268
    %v358 = vpop.f32.mrf.mxu0
    %v359 = vadd.f32 %v290, %v358
    %v360 = vpop.f32.mrf.mxu0
    %361 = vdwg.mxu0
    %362 = vst [vmem:[#allocation10] sm:$0xff] %v359
    // Predicated region
    $region46: #{tpu_custom_call.1} parent=1 // pred_check
      _
    $region47: #{tpu_custom_call.1} parent=1 // pred_check_branch
      %364 = sbr.rel (0) target = $region49
    $region48: #{tpu_custom_call.1} parent=1 // pred_region
      %s366 = ssub.s32 128, 128
      %367 = vsyncadd [#allocation4], %s366
      %s369 = sshll.u32 [#allocation10], 4
      %s370 = int_to_ptr.vmem [resolvable:$true] %s369
      %372 = dma.vmem_to_hbm [thread:$0]  %s370, 128, %s7, [#allocation4]
    $region49: #{tpu_custom_call.1} parent=1 // pred_fallthru
      _
    // Predicated region
    $region50: #{tpu_custom_call.1} parent=1 // pred_check
      _
    $region51: #{tpu_custom_call.1} parent=1 // pred_check_branch
      %374 = sbr.rel (0) target = $region53
    $region52: #{tpu_custom_call.1} parent=1 // pred_region
      %375 = dma.done [#allocation4], 128
    $region53: #{tpu_custom_call.1} parent=1 // pred_fallthru
      _
    %376 = vsyncpa [#allocation3], 1
    %377 = vsyncpa [#allocation6], 1
    %378 = vsyncpa [#allocation9], 1
    %379 = vsyncpa [#allocation4], 1

// kernel: tpu_custom_call.1
$region0: #{tpu_custom_call.1}
  #allocation0 [shape = 'u32[]', space=smem, size = 0x4, offset = 0x4, fixed_abs, tag = 'smem constant byte address 0x4 - core index']
  #allocation1 [shape = 'u32[144,128]{1,0:T(1,128)}', space=vmem, size = 0x12000, scoped, tag = 'internal scratch']
  %s0 = inlined_call_operand.hbm [shape: f32[8,128], index: 0, kind: input, shape index: {}]
  %s1 = inlined_call_operand.hbm [shape: f32[128,128], index: 1, kind: input, shape index: {}]
  %s2 = inlined_call_operand.vmem [shape: f32[1,128], index: 2, kind: input, shape index: {}]
  %s3 = inlined_call_operand.hbm [shape: f32[128,128], index: 3, kind: input, shape index: {}]
  %s4 = inlined_call_operand.vmem [shape: f32[1,128], index: 4, kind: input, shape index: {}]
  %s5 = inlined_call_operand.hbm [shape: f32[128,128], index: 5, kind: input, shape index: {}]
  %s6 = inlined_call_operand.vmem [shape: f32[1,128], index: 6, kind: input, shape index: {}]
  %s7 = inlined_call_operand.hbm [shape: f32[8,128], index: 7, kind: output, shape index: {}]
  %s8 = sld [smem:[#allocation0]]
  $region54: #{tpu_custom_call.1} parent=0
    _
  %s10 = ssub.s32 1, %s8
  %s11 = scalar_select 0, %s10, %s8
  $region1: #{tpu_custom_call.1} parent=0
    #allocation2 [shape = 'u8[4096]{0}', space=vmem, size = 0x1000, scoped, tag = 'input window, operand 0, single buffered']
    #allocation3 [shape = 's32[1]{0}', space=sflag, size = 0x4, scoped, tag = 'scoped memory for tpu_custom_call.1']
    #allocation4 [shape = 's32[1]{0}', space=sflag, size = 0x4, scoped, tag = 'scoped memory for tpu_custom_call.1']
    #allocation5 [shape = 'u8[65536]{0}', space=vmem, size = 0x10000, scoped, tag = 'input window, operand 1, single buffered']
    #allocation6 [shape = 's32[1]{0}', space=sflag, size = 0x4, scoped, tag = 'scoped memory for tpu_custom_call.1']
    #allocation7 [shape = 'u8[65536]{0}', space=vmem, size = 0x10000, scoped, tag = 'input window, operand 3, single buffered']
    #allocation8 [shape = 'u8[65536]{0}', space=vmem, size = 0x10000, scoped, tag = 'input window, operand 5, single buffered']
    #allocation9 [shape = 's32[1]{0}', space=sflag, size = 0x4, scoped, tag = 'scoped memory for tpu_custom_call.1']
    #allocation10 [shape = 'u8[4096]{0}', space=vmem, size = 0x1000, scoped, tag = 'output window, operand 0, single buffered']
    %12 = vsyncpa [#allocation3], 0
    %13 = vsyncpa [#allocation6], 0
    %14 = vsyncpa [#allocation9], 0
    %15 = vsyncpa [#allocation4], 0
    // Predicated region
    $region2: #{tpu_custom_call.1} parent=1 // pred_check
      _
    $region3: #{tpu_custom_call.1} parent=1 // pred_check_branch
      %17 = sbr.rel (0) target = $region5
    $region4: #{tpu_custom_call.1} parent=1 // pred_region
      %s19 = ssub.s32 128, 128
      %20 = vsyncadd [#allocation3], %s19
      %s22 = sshll.u32 [#allocation2], 4
      %s23 = int_to_ptr.vmem [resolvable:$true] %s22
      %25 = dma.hbm_to_vmem [thread:$0]  %s0, 128, %s23, [#allocation3]
    $region5: #{tpu_custom_call.1} parent=1 // pred_fallthru
      _
    // Predicated region
    $region6: #{tpu_custom_call.1} parent=1 // pred_check
      _
    $region7: #{tpu_custom_call.1} parent=1 // pred_check_branch
      %27 = sbr.rel (0) target = $region9
    $region8: #{tpu_custom_call.1} parent=1 // pred_region
      %s29 = ssub.s32 2048, 2048
      %30 = vsyncadd [#allocation6], %s29
      %s31 = sshll.u32 [#allocation5], 4
      %s32 = int_to_ptr.vmem [resolvable:$true] %s31
      %37 = dma.hbm_to_vmem [thread:$0]  %s1, 2048, %s32, [#allocation6], 128, 128, 8
    $region9: #{tpu_custom_call.1} parent=1 // pred_fallthru
      _
    // Predicated region
    $region10: #{tpu_custom_call.1} parent=1 // pred_check
      _
    $region11: #{tpu_custom_call.1} parent=1 // pred_check_branch
      %39 = sbr.rel (0) target = $region13
    $region12: #{tpu_custom_call.1} parent=1 // pred_region
      _
    $region13: #{tpu_custom_call.1} parent=1 // pred_fallthru
      _
    // Predicated region
    $region14: #{tpu_custom_call.1} parent=1 // pred_check
      _
    $region15: #{tpu_custom_call.1} parent=1 // pred_check_branch
      %41 = sbr.rel (0) target = $region17
    $region16: #{tpu_custom_call.1} parent=1 // pred_region
      %s43 = ssub.s32 2048, 2048
      %44 = vsyncadd [#allocation6], %s43
      %s45 = sshll.u32 [#allocation7], 4
      %s46 = int_to_ptr.vmem [resolvable:$true] %s45
      %51 = dma.hbm_to_vmem [thread:$0]  %s3, 2048, %s46, [#allocation6], 128, 128, 8
    $region17: #{tpu_custom_call.1} parent=1 // pred_fallthru
      _
    // Predicated region
    $region18: #{tpu_custom_call.1} parent=1 // pred_check
      _
    $region19: #{tpu_custom_call.1} parent=1 // pred_check_branch
      %53 = sbr.rel (0) target = $region21
    $region20: #{tpu_custom_call.1} parent=1 // pred_region
      _
    $region21: #{tpu_custom_call.1} parent=1 // pred_fallthru
      _
    // Predicated region
    $region22: #{tpu_custom_call.1} parent=1 // pred_check
      _
    $region23: #{tpu_custom_call.1} parent=1 // pred_check_branch
      %55 = sbr.rel (0) target = $region25
    $region24: #{tpu_custom_call.1} parent=1 // pred_region
      %s57 = ssub.s32 2048, 2048
      %58 = vsyncadd [#allocation9], %s57
      %s59 = sshll.u32 [#allocation8], 4
      %s60 = int_to_ptr.vmem [resolvable:$true] %s59
      %65 = dma.hbm_to_vmem [thread:$0]  %s5, 2048, %s60, [#allocation9], 128, 128, 8
    $region25: #{tpu_custom_call.1} parent=1 // pred_fallthru
      _
    // Predicated region
    $region26: #{tpu_custom_call.1} parent=1 // pred_check
      _
    $region27: #{tpu_custom_call.1} parent=1 // pred_check_branch
      %67 = sbr.rel (0) target = $region29
    $region28: #{tpu_custom_call.1} parent=1 // pred_region
      _
    $region29: #{tpu_custom_call.1} parent=1 // pred_fallthru
      _
    // Predicated region
    $region30: #{tpu_custom_call.1} parent=1 // pred_check
      _
    $region31: #{tpu_custom_call.1} parent=1 // pred_check_branch
      %69 = sbr.rel (0) target = $region33
    $region32: #{tpu_custom_call.1} parent=1 // pred_region
      %70 = dma.done [#allocation3], 128
    $region33: #{tpu_custom_call.1} parent=1 // pred_fallthru
      _
    // Predicated region
    $region34: #{tpu_custom_call.1} parent=1 // pred_check
      _
    $region35: #{tpu_custom_call.1} parent=1 // pred_check_branch
      %72 = sbr.rel (0) target = $region37
    $region36: #{tpu_custom_call.1} parent=1 // pred_region
      %73 = dma.done [#allocation6], 2048
    $region37: #{tpu_custom_call.1} parent=1 // pred_fallthru
      _
    // Predicated region
    $region38: #{tpu_custom_call.1} parent=1 // pred_check
      _
    $region39: #{tpu_custom_call.1} parent=1 // pred_check_branch
      %75 = sbr.rel (0) target = $region41
    $region40: #{tpu_custom_call.1} parent=1 // pred_region
      %76 = dma.done [#allocation6], 2048
    $region41: #{tpu_custom_call.1} parent=1 // pred_fallthru
      _
    // Predicated region
    $region42: #{tpu_custom_call.1} parent=1 // pred_check
      _
    $region43: #{tpu_custom_call.1} parent=1 // pred_check_branch
      %78 = sbr.rel (0) target = $region45
    $region44: #{tpu_custom_call.1} parent=1 // pred_region
      %79 = dma.done [#allocation9], 2048
    $region45: #{tpu_custom_call.1} parent=1 // pred_fallthru
      _
    %v80 = vld [vmem:[#allocation2] sm:$0xff]
    %v81 = vld [vmem:[#allocation5] sm:$0xff]
    %v82 = vld [vmem:[#allocation5 + $0x8] sm:$0xff]
    %v83 = vld [vmem:[#allocation5 + $0x10] sm:$0xff]
    %v84 = vld [vmem:[#allocation5 + $0x18] sm:$0xff]
    %v85 = vld [vmem:[#allocation5 + $0x20] sm:$0xff]
    %v86 = vld [vmem:[#allocation5 + $0x28] sm:$0xff]
    %v87 = vld [vmem:[#allocation5 + $0x30] sm:$0xff]
    %v88 = vld [vmem:[#allocation5 + $0x38] sm:$0xff]
    %v89 = vld [vmem:[#allocation5 + $0x40] sm:$0xff]
    %v90 = vld [vmem:[#allocation5 + $0x48] sm:$0xff]
    %v91 = vld [vmem:[#allocation5 + $0x50] sm:$0xff]
    %v92 = vld [vmem:[#allocation5 + $0x58] sm:$0xff]
    %v93 = vld [vmem:[#allocation5 + $0x60] sm:$0xff]
    %v94 = vld [vmem:[#allocation5 + $0x68] sm:$0xff]
    %v95 = vld [vmem:[#allocation5 + $0x70] sm:$0xff]
    %v96 = vld [vmem:[#allocation5 + $0x78] sm:$0xff]
    %v97 = vld [vmem:[%s2] sm:$0x1]
    %v99 = vlaneseq
    %v100 = vshrl.u32 %v99, 7
    %v101 = vsub.s32 0, %v100
    %v102 = vrot.slane %v97, %v101
    %104 = vmatprep.subr.mxu0 0.0
    %105 = vmatpush1.msra.mxu0 %v96
    %106 = vmatprep.subr.mxu0 0.0
    %107 = vmatpush1.msra.mxu0 %v95
    %108 = vmatprep.subr.mxu0 0.0
    %109 = vmatpush1.msra.mxu0 %v94
    %110 = vmatprep.subr.mxu0 0.0
    %111 = vmatpush1.msra.mxu0 %v93
    %112 = vmatprep.subr.mxu0 0.0
    %113 = vmatpush1.msra.mxu0 %v92
    %114 = vmatprep.subr.mxu0 0.0
    %115 = vmatpush1.msra.mxu0 %v91
    %116 = vmatprep.subr.mxu0 0.0
    %117 = vmatpush1.msra.mxu0 %v90
    %118 = vmatprep.subr.mxu0 0.0
    %119 = vmatpush1.msra.mxu0 %v89
    %120 = vmatprep.subr.mxu0 0.0
    %121 = vmatpush1.msra.mxu0 %v88
    %122 = vmatprep.subr.mxu0 0.0
    %123 = vmatpush1.msra.mxu0 %v87
    %124 = vmatprep.subr.mxu0 0.0
    %125 = vmatpush1.msra.mxu0 %v86
    %126 = vmatprep.subr.mxu0 0.0
    %127 = vmatpush1.msra.mxu0 %v85
    %128 = vmatprep.subr.mxu0 0.0
    %129 = vmatpush1.msra.mxu0 %v84
    %130 = vmatprep.subr.mxu0 0.0
    %131 = vmatpush1.msra.mxu0 %v83
    %132 = vmatprep.subr.mxu0 0.0
    %133 = vmatpush1.msra.mxu0 %v82
    %134 = vmatprep.subr.mxu0 0.0
    %135 = vmatpush1.msra.mxu0 %v81
    %136 = vmatprep.subr.mxu0 0.0
    %137 = vmatpush2.msra.mxu0 0.0
    %138 = vmatprep.subr.mxu0 0.0
    %139 = vmatpush2.msra.mxu0 0.0
    %140 = vmatprep.subr.mxu0 0.0
    %141 = vmatpush2.msra.mxu0 0.0
    %142 = vmatprep.subr.mxu0 0.0
    %143 = vmatpush2.msra.mxu0 0.0
    %144 = vmatprep.subr.mxu0 0.0
    %145 = vmatpush2.msra.mxu0 0.0
    %146 = vmatprep.subr.mxu0 0.0
    %147 = vmatpush2.msra.mxu0 0.0
    %148 = vmatprep.subr.mxu0 0.0
    %149 = vmatpush2.msra.mxu0 0.0
    %150 = vmatprep.subr.mxu0 0.0
    %151 = vmatpush2.msra.mxu0 0.0
    %152 = vmatprep.subr.mxu0 0.0
    %153 = vmatpush2.msra.mxu0 0.0
    %154 = vmatprep.subr.mxu0 0.0
    %155 = vmatpush2.msra.mxu0 0.0
    %156 = vmatprep.subr.mxu0 0.0
    %157 = vmatpush2.msra.mxu0 0.0
    %158 = vmatprep.subr.mxu0 0.0
    %159 = vmatpush2.msra.mxu0 0.0
    %160 = vmatprep.subr.mxu0 0.0
    %161 = vmatpush2.msra.mxu0 0.0
    %162 = vmatprep.subr.mxu0 0.0
    %163 = vmatpush2.msra.mxu0 0.0
    %164 = vmatprep.subr.mxu0 0.0
    %165 = vmatpush2.msra.mxu0 0.0
    %166 = vmatprep.subr.mxu0 0.0
    %167 = vmatpush2.msra.mxu0 0.0
    %168 = vmatprep.mubr.f32.mxu0 0.0
    %169 = vmatmul.mubr.f32.gmra.mxu0 %v80
    %v170 = vpop.f32.mrf.mxu0
    %v171 = vadd.f32 %v102, %v170
    %v172 = vpop.f32.mrf.mxu0
    %173 = vdwg.mxu0
    %v174 = vmax.f32 %v171, 0.0
    %v175 = vld [vmem:[#allocation7] sm:$0xff]
    %v176 = vld [vmem:[#allocation7 + $0x8] sm:$0xff]
    %v177 = vld [vmem:[#allocation7 + $0x10] sm:$0xff]
    %v178 = vld [vmem:[#allocation7 + $0x18] sm:$0xff]
    %v179 = vld [vmem:[#allocation7 + $0x20] sm:$0xff]
    %v180 = vld [vmem:[#allocation7 + $0x28] sm:$0xff]
    %v181 = vld [vmem:[#allocation7 + $0x30] sm:$0xff]
    %v182 = vld [vmem:[#allocation7 + $0x38] sm:$0xff]
    %v183 = vld [vmem:[#allocation7 + $0x40] sm:$0xff]
    %v184 = vld [vmem:[#allocation7 + $0x48] sm:$0xff]
    %v185 = vld [vmem:[#allocation7 + $0x50] sm:$0xff]
    %v186 = vld [vmem:[#allocation7 + $0x58] sm:$0xff]
    %v187 = vld [vmem:[#allocation7 + $0x60] sm:$0xff]
    %v188 = vld [vmem:[#allocation7 + $0x68] sm:$0xff]
    %v189 = vld [vmem:[#allocation7 + $0x70] sm:$0xff]
    %v190 = vld [vmem:[#allocation7 + $0x78] sm:$0xff]
    %v191 = vld [vmem:[%s4] sm:$0x1]
    %v193 = vlaneseq
    %v194 = vshrl.u32 %v193, 7
    %v195 = vsub.s32 0, %v194
    %v196 = vrot.slane %v191, %v195
    %198 = vmatprep.subr.mxu0 0.0
    %199 = vmatpush1.msra.mxu0 %v190
    %200 = vmatprep.subr.mxu0 0.0
    %201 = vmatpush1.msra.mxu0 %v189
    %202 = vmatprep.subr.mxu0 0.0
    %203 = vmatpush1.msra.mxu0 %v188
    %204 = vmatprep.subr.mxu0 0.0
    %205 = vmatpush1.msra.mxu0 %v187
    %206 = vmatprep.subr.mxu0 0.0
    %207 = vmatpush1.msra.mxu0 %v186
    %208 = vmatprep.subr.mxu0 0.0
    %209 = vmatpush1.msra.mxu0 %v185
    %210 = vmatprep.subr.mxu0 0.0
    %211 = vmatpush1.msra.mxu0 %v184
    %212 = vmatprep.subr.mxu0 0.0
    %213 = vmatpush1.msra.mxu0 %v183
    %214 = vmatprep.subr.mxu0 0.0
    %215 = vmatpush1.msra.mxu0 %v182
    %216 = vmatprep.subr.mxu0 0.0
    %217 = vmatpush1.msra.mxu0 %v181
    %218 = vmatprep.subr.mxu0 0.0
    %219 = vmatpush1.msra.mxu0 %v180
    %220 = vmatprep.subr.mxu0 0.0
    %221 = vmatpush1.msra.mxu0 %v179
    %222 = vmatprep.subr.mxu0 0.0
    %223 = vmatpush1.msra.mxu0 %v178
    %224 = vmatprep.subr.mxu0 0.0
    %225 = vmatpush1.msra.mxu0 %v177
    %226 = vmatprep.subr.mxu0 0.0
    %227 = vmatpush1.msra.mxu0 %v176
    %228 = vmatprep.subr.mxu0 0.0
    %229 = vmatpush1.msra.mxu0 %v175
    %230 = vmatprep.subr.mxu0 0.0
    %231 = vmatpush2.msra.mxu0 0.0
    %232 = vmatprep.subr.mxu0 0.0
    %233 = vmatpush2.msra.mxu0 0.0
    %234 = vmatprep.subr.mxu0 0.0
    %235 = vmatpush2.msra.mxu0 0.0
    %236 = vmatprep.subr.mxu0 0.0
    %237 = vmatpush2.msra.mxu0 0.0
    %238 = vmatprep.subr.mxu0 0.0
    %239 = vmatpush2.msra.mxu0 0.0
    %240 = vmatprep.subr.mxu0 0.0
    %241 = vmatpush2.msra.mxu0 0.0
    %242 = vmatprep.subr.mxu0 0.0
    %243 = vmatpush2.msra.mxu0 0.0
    %244 = vmatprep.subr.mxu0 0.0
    %245 = vmatpush2.msra.mxu0 0.0
    %246 = vmatprep.subr.mxu0 0.0
    %247 = vmatpush2.msra.mxu0 0.0
    %248 = vmatprep.subr.mxu0 0.0
    %249 = vmatpush2.msra.mxu0 0.0
    %250 = vmatprep.subr.mxu0 0.0
    %251 = vmatpush2.msra.mxu0 0.0
    %252 = vmatprep.subr.mxu0 0.0
    %253 = vmatpush2.msra.mxu0 0.0
    %254 = vmatprep.subr.mxu0 0.0
    %255 = vmatpush2.msra.mxu0 0.0
    %256 = vmatprep.subr.mxu0 0.0
    %257 = vmatpush2.msra.mxu0 0.0
    %258 = vmatprep.subr.mxu0 0.0
    %259 = vmatpush2.msra.mxu0 0.0
    %260 = vmatprep.subr.mxu0 0.0
    %261 = vmatpush2.msra.mxu0 0.0
    %262 = vmatprep.mubr.f32.mxu0 0.0
    %263 = vmatmul.mubr.f32.gmra.mxu0 %v174
    %v264 = vpop.f32.mrf.mxu0
    %v265 = vadd.f32 %v196, %v264
    %v266 = vpop.f32.mrf.mxu0
    %267 = vdwg.mxu0
    %v268 = vmax.f32 %v265, 0.0
    %v269 = vld [vmem:[#allocation8] sm:$0xff]
    %v270 = vld [vmem:[#allocation8 + $0x8] sm:$0xff]
    %v271 = vld [vmem:[#allocation8 + $0x10] sm:$0xff]
    %v272 = vld [vmem:[#allocation8 + $0x18] sm:$0xff]
    %v273 = vld [vmem:[#allocation8 + $0x20] sm:$0xff]
    %v274 = vld [vmem:[#allocation8 + $0x28] sm:$0xff]
    %v275 = vld [vmem:[#allocation8 + $0x30] sm:$0xff]
    %v276 = vld [vmem:[#allocation8 + $0x38] sm:$0xff]
    %v277 = vld [vmem:[#allocation8 + $0x40] sm:$0xff]
    %v278 = vld [vmem:[#allocation8 + $0x48] sm:$0xff]
    %v279 = vld [vmem:[#allocation8 + $0x50] sm:$0xff]
    %v280 = vld [vmem:[#allocation8 + $0x58] sm:$0xff]
    %v281 = vld [vmem:[#allocation8 + $0x60] sm:$0xff]
    %v282 = vld [vmem:[#allocation8 + $0x68] sm:$0xff]
    %v283 = vld [vmem:[#allocation8 + $0x70] sm:$0xff]
    %v284 = vld [vmem:[#allocation8 + $0x78] sm:$0xff]
    %v285 = vld [vmem:[%s6] sm:$0x1]
    %v287 = vlaneseq
    %v288 = vshrl.u32 %v287, 7
    %v289 = vsub.s32 0, %v288
    %v290 = vrot.slane %v285, %v289
    %292 = vmatprep.subr.mxu0 0.0
    %293 = vmatpush1.msra.mxu0 %v284
    %294 = vmatprep.subr.mxu0 0.0
    %295 = vmatpush1.msra.mxu0 %v283
    %296 = vmatprep.subr.mxu0 0.0
    %297 = vmatpush1.msra.mxu0 %v282
    %298 = vmatprep.subr.mxu0 0.0
    %299 = vmatpush1.msra.mxu0 %v281
    %300 = vmatprep.subr.mxu0 0.0
    %301 = vmatpush1.msra.mxu0 %v280
    %302 = vmatprep.subr.mxu0 0.0
    %303 = vmatpush1.msra.mxu0 %v279
    %304 = vmatprep.subr.mxu0 0.0
    %305 = vmatpush1.msra.mxu0 %v278
    %306 = vmatprep.subr.mxu0 0.0
    %307 = vmatpush1.msra.mxu0 %v277
    %308 = vmatprep.subr.mxu0 0.0
    %309 = vmatpush1.msra.mxu0 %v276
    %310 = vmatprep.subr.mxu0 0.0
    %311 = vmatpush1.msra.mxu0 %v275
    %312 = vmatprep.subr.mxu0 0.0
    %313 = vmatpush1.msra.mxu0 %v274
    %314 = vmatprep.subr.mxu0 0.0
    %315 = vmatpush1.msra.mxu0 %v273
    %316 = vmatprep.subr.mxu0 0.0
    %317 = vmatpush1.msra.mxu0 %v272
    %318 = vmatprep.subr.mxu0 0.0
    %319 = vmatpush1.msra.mxu0 %v271
    %320 = vmatprep.subr.mxu0 0.0
    %321 = vmatpush1.msra.mxu0 %v270
    %322 = vmatprep.subr.mxu0 0.0
    %323 = vmatpush1.msra.mxu0 %v269
    %324 = vmatprep.subr.mxu0 0.0
    %325 = vmatpush2.msra.mxu0 0.0
    %326 = vmatprep.subr.mxu0 0.0
    %327 = vmatpush2.msra.mxu0 0.0
    %328 = vmatprep.subr.mxu0 0.0
    %329 = vmatpush2.msra.mxu0 0.0
    %330 = vmatprep.subr.mxu0 0.0
    %331 = vmatpush2.msra.mxu0 0.0
    %332 = vmatprep.subr.mxu0 0.0
    %333 = vmatpush2.msra.mxu0 0.0
    %334 = vmatprep.subr.mxu0 0.0
    %335 = vmatpush2.msra.mxu0 0.0
    %336 = vmatprep.subr.mxu0 0.0
    %337 = vmatpush2.msra.mxu0 0.0
    %338 = vmatprep.subr.mxu0 0.0
    %339 = vmatpush2.msra.mxu0 0.0
    %340 = vmatprep.subr.mxu0 0.0
    %341 = vmatpush2.msra.mxu0 0.0
    %342 = vmatprep.subr.mxu0 0.0
    %343 = vmatpush2.msra.mxu0 0.0
    %344 = vmatprep.subr.mxu0 0.0
    %345 = vmatpush2.msra.mxu0 0.0
    %346 = vmatprep.subr.mxu0 0.0
    %347 = vmatpush2.msra.mxu0 0.0
    %348 = vmatprep.subr.mxu0 0.0
    %349 = vmatpush2.msra.mxu0 0.0
    %350 = vmatprep.subr.mxu0 0.0
    %351 = vmatpush2.msra.mxu0 0.0
    %352 = vmatprep.subr.mxu0 0.0
    %353 = vmatpush2.msra.mxu0 0.0
    %354 = vmatprep.subr.mxu0 0.0
    %355 = vmatpush2.msra.mxu0 0.0
    %356 = vmatprep.mubr.f32.mxu0 0.0
    %357 = vmatmul.mubr.f32.gmra.mxu0 %v268
    %v358 = vpop.f32.mrf.mxu0
    %v359 = vadd.f32 %v290, %v358
    %v360 = vpop.f32.mrf.mxu0
    %361 = vdwg.mxu0
    %362 = vst [vmem:[#allocation10] sm:$0xff] %v359
    // Predicated region
    $region46: #{tpu_custom_call.1} parent=1 // pred_check
      _
    $region47: #{tpu_custom_call.1} parent=1 // pred_check_branch
      %364 = sbr.rel (0) target = $region49
    $region48: #{tpu_custom_call.1} parent=1 // pred_region
      %s366 = ssub.s32 128, 128
      %367 = vsyncadd [#allocation4], %s366
      %s369 = sshll.u32 [#allocation10], 4
      %s370 = int_to_ptr.vmem [resolvable:$true] %s369
      %372 = dma.vmem_to_hbm [thread:$0]  %s370, 128, %s7, [#allocation4]
    $region49: #{tpu_custom_call.1} parent=1 // pred_fallthru
      _
    // Predicated region
    $region50: #{tpu_custom_call.1} parent=1 // pred_check
      _
    $region51: #{tpu_custom_call.1} parent=1 // pred_check_branch
      %374 = sbr.rel (0) target = $region53
    $region52: #{tpu_custom_call.1} parent=1 // pred_region
      %375 = dma.done [#allocation4], 128
    $region53: #{tpu_custom_call.1} parent=1 // pred_fallthru
      _
    %376 = vsyncpa [#allocation3], 1
    %377 = vsyncpa [#allocation6], 1
    %378 = vsyncpa [#allocation9], 1
    %379 = vsyncpa [#allocation4], 1

</llo_original>
